<compile_context>
chip_gen: v6e
topology: v6e:2x2x1
jax: 0.10.0
libtpu: 0.0.40
codegen_flags: <defaults>
</compile_context>

<pallas_src>
import jax
import jax.numpy as jnp
from jax.experimental import pallas as pl
from jax.experimental.pallas import tpu as pltpu

BN_EPS = 1e-5


def _affine_kernel(x_ref, a_ref, b_ref, o_ref):
    # x_ref: (Bm, Bl)   a_ref/b_ref: (1, Bl)   o_ref: (Bm, Bl)
    o_ref[...] = x_ref[...] * a_ref[...] + b_ref[...]


def norm_data_forward(x, gamma, beta, running_mean, running_var, eps=BN_EPS):
    """x: (bs, c, num_joints, step); BN params: (c*num_joints,). Returns same shape as x."""
    bs, c, num_joints, step = x.shape
    C = c * num_joints
    assert gamma.shape == (C,), (gamma.shape, C)

    # Fold eval-mode BN into a per-channel affine (trace time, f32 for stability).
    inv_std = 1.0 / jnp.sqrt(running_var.astype(jnp.float32) + eps)
    a32 = gamma.astype(jnp.float32) * inv_std
    b32 = beta.astype(jnp.float32) - running_mean.astype(jnp.float32) * a32

    # Flatten (C, step) -> L so the lane axis is wide; expand the per-channel affine
    # to match (channel index varies slowest in the row-major flatten).
    L = C * step
    a_row = jnp.repeat(a32.astype(x.dtype), step).reshape(1, L)
    b_row = jnp.repeat(b32.astype(x.dtype), step).reshape(1, L)
    x2 = x.reshape(bs, L)

    itemsize = jnp.dtype(x.dtype).itemsize
    budget_bytes = 2 << 20                       # ~2 MiB of x per block

    # Lane-axis tiling: keep the full row unless a single row would overflow the budget.
    if L * itemsize <= budget_bytes or L <= 128:
        bl = L                                   # full row (block dim == array dim is allowed)
    else:
        bl = max(128, (budget_bytes // (8 * itemsize) // 128) * 128)  # multiple of 128
        bl = min(bl, max(128, (L // 128) * 128))

    # Batch-axis tiling: multiples of 8 sublanes (or the full batch).
    bm = max(1, budget_bytes // (bl * itemsize))
    if bm >= bs:
        bm = bs
    else:
        bm = max(8, (bm // 8) * 8)
        bm = min(bm, bs)

    grid = (pl.cdiv(bs, bm), pl.cdiv(L, bl))

    out = pl.pallas_call(
        _affine_kernel,
        out_shape=jax.ShapeDtypeStruct((bs, L), x.dtype),
        grid=grid,
        in_specs=[
            pl.BlockSpec((bm, bl), lambda i, j: (i, j)),
            pl.BlockSpec((1, bl), lambda i, j: (0, j)),
            pl.BlockSpec((1, bl), lambda i, j: (0, j)),
        ],
        out_specs=pl.BlockSpec((bm, bl), lambda i, j: (i, j)),
        compiler_params=pltpu.CompilerParams(
            dimension_semantics=("parallel", "parallel"),
        ),
    )(x2, a_row, b_row)

    return out.reshape(bs, c, num_joints, step)


def norm_data_ref(x, gamma, beta, running_mean, running_var, eps=BN_EPS):
    """Pure-JAX reference (eval-mode BatchNorm1d semantics)."""
    bs, c, num_joints, step = x.shape
    C = c * num_joints
    xr = x.reshape(bs, C, step)
    a = gamma / jnp.sqrt(running_var + eps)
    b = beta - running_mean * a
    y = xr * a[None, :, None] + b[None, :, None]
    return y.reshape(bs, c, num_joints, step)


if __name__ == "__main__":
    key = jax.random.PRNGKey(0)
    (k_x,) = jax.random.split(key, 1)

    # norm_data(dim=4) -> BatchNorm1d(4*18): c * num_joints must equal dim*18.
    dim = 4
    bs, c, num_joints, step = 2, dim, 18, 16
    C = c * num_joints  # 72

    x = jax.random.normal(k_x, (bs, c, num_joints, step), jnp.float32)

    # Deterministic BatchNorm parameters / running stats (eval mode).
    gamma = 1.0 + 0.10 * jnp.arange(C, dtype=jnp.float32)
    beta = 0.05 * jnp.arange(C, dtype=jnp.float32)
    running_mean = 0.01 * jnp.arange(C, dtype=jnp.float32)
    running_var = 1.0 + 0.02 * jnp.arange(C, dtype=jnp.float32)

    out = norm_data_forward(x, gamma, beta, running_mean, running_var)
    jax.block_until_ready(out)

    ref = norm_data_ref(x, gamma, beta, running_mean, running_var)
    assert out.shape == (bs, c, num_joints, step), out.shape
    assert jnp.allclose(out, ref, atol=1e-5, rtol=1e-5), float(jnp.max(jnp.abs(out - ref)))

    print("KERNEL_OK")
</pallas_src>

<mosaic_0001>
module attributes {stable_mosaic.version = 11 : i64} {
  func.func @_affine_kernel(%arg0: i32, %arg1: i32, %arg2: memref<2x1152xf32, #tpu.memory_space<vmem>>, %arg3: memref<1x1152xf32, #tpu.memory_space<vmem>>, %arg4: memref<1x1152xf32, #tpu.memory_space<vmem>>, %arg5: memref<2x1152xf32, #tpu.memory_space<vmem>>) attributes {dimension_semantics = [#tpu.dimension_semantics<parallel>, #tpu.dimension_semantics<parallel>], iteration_bounds = array<i64: 1, 1>, scalar_prefetch = 0 : i64, scratch_operands = 0 : i64, tpu.core_type = #tpu.core_type<tc>, window_params = [{transform_indices = @transform_0, window_bounds = array<i64: 2, 1152>}, {transform_indices = @transform_1, window_bounds = array<i64: 1, 1152>}, {transform_indices = @transform_2, window_bounds = array<i64: 1, 1152>}, {transform_indices = @transform_3, window_bounds = array<i64: 2, 1152>}]} {
    %c0 = arith.constant 0 : index
    %c0_0 = arith.constant 0 : index
    %0 = vector.load %arg2[%c0, %c0_0] : memref<2x1152xf32, #tpu.memory_space<vmem>>, vector<2x1152xf32>
    %c0_1 = arith.constant 0 : index
    %c0_2 = arith.constant 0 : index
    %1 = vector.load %arg3[%c0_1, %c0_2] : memref<1x1152xf32, #tpu.memory_space<vmem>>, vector<1x1152xf32>
    %2 = vector.broadcast %1 : vector<1x1152xf32> to vector<2x1152xf32>
    %3 = arith.mulf %0, %2 : vector<2x1152xf32>
    %c0_3 = arith.constant 0 : index
    %c0_4 = arith.constant 0 : index
    %4 = vector.load %arg4[%c0_3, %c0_4] : memref<1x1152xf32, #tpu.memory_space<vmem>>, vector<1x1152xf32>
    %5 = vector.broadcast %4 : vector<1x1152xf32> to vector<2x1152xf32>
    %6 = arith.addf %3, %5 : vector<2x1152xf32>
    %c0_5 = arith.constant 0 : index
    %c0_6 = arith.constant 0 : index
    %7 = vector.load %arg5[%c0_5, %c0_6] : memref<2x1152xf32, #tpu.memory_space<vmem>>, vector<2x1152xf32>
    tpu.vector_store %arg5[%c0_5, %c0_6], %6 {strides = array<i32>} : memref<2x1152xf32, #tpu.memory_space<vmem>>, vector<2x1152xf32>,
    return
  }
  func.func @transform_0(%arg0: i32, %arg1: i32) -> (i32, i32) {
    %c0_i32 = arith.constant 0 : i32
    return %arg0, %arg1 : i32, i32
  }
  func.func @transform_1(%arg0: i32, %arg1: i32) -> (i32, i32) {
    %c0_i32 = arith.constant 0 : i32
    %c0_i32_0 = arith.constant 0 : i32
    return %c0_i32, %arg1 : i32, i32
  }
  func.func @transform_2(%arg0: i32, %arg1: i32) -> (i32, i32) {
    %c0_i32 = arith.constant 0 : i32
    %c0_i32_0 = arith.constant 0 : i32
    return %c0_i32, %arg1 : i32, i32
  }
  func.func @transform_3(%arg0: i32, %arg1: i32) -> (i32, i32) {
    %c0_i32 = arith.constant 0 : i32
    return %arg0, %arg1 : i32, i32
  }
}

</mosaic_0001>

<llo_original>
// kernel: tpu_custom_call.1
$region0: #{tpu_custom_call.1}
  #allocation0 [shape = 'u32[]', space=smem, size = 0x4, offset = 0x4, fixed_abs, tag = 'smem constant byte address 0x4 - core index']
  #allocation1 [shape = 'u32[144,128]{1,0:T(1,128)}', space=vmem, size = 0x12000, scoped, tag = 'internal scratch']
  %s0 = inlined_call_operand.hbm [shape: f32[2,1152], index: 0, kind: input, shape index: {}]
  %s1 = inlined_call_operand.hbm [shape: f32[1,1152], index: 1, kind: input, shape index: {}]
  %s2 = inlined_call_operand.hbm [shape: f32[1,1152], index: 2, kind: input, shape index: {}]
  %s3 = inlined_call_operand.hbm [shape: f32[2,1152], index: 3, kind: output, shape index: {}]
  %s4 = sld [smem:[#allocation0]]
  $region34: #{tpu_custom_call.1} parent=0
    _
  %s6 = ssub.s32 1, %s4
  %s7 = scalar_select 0, %s6, %s4
  $region1: #{tpu_custom_call.1} parent=0
    #allocation2 [shape = 'u8[9216]{0}', space=vmem, size = 0x2400, scoped, tag = 'input window, operand 0, single buffered']
    #allocation3 [shape = 's32[1]{0}', space=sflag, size = 0x4, scoped, tag = 'scoped memory for tpu_custom_call.1']
    #allocation4 [shape = 's32[1]{0}', space=sflag, size = 0x4, scoped, tag = 'scoped memory for tpu_custom_call.1']
    #allocation5 [shape = 'u8[4608]{0}', space=vmem, size = 0x1400, scoped, tag = 'input window, operand 1, single buffered']
    #allocation6 [shape = 's32[1]{0}', space=sflag, size = 0x4, scoped, tag = 'scoped memory for tpu_custom_call.1']
    #allocation7 [shape = 'u8[4608]{0}', space=vmem, size = 0x1400, scoped, tag = 'input window, operand 2, single buffered']
    #allocation8 [shape = 'u8[9216]{0}', space=vmem, size = 0x2400, scoped, tag = 'output window, operand 0, single buffered']
    %8 = vsyncpa [#allocation3], 0
    %9 = vsyncpa [#allocation6], 0
    %10 = vsyncpa [#allocation4], 0
    // Predicated region
    $region2: #{tpu_custom_call.1} parent=1 // pred_check
      _
    $region3: #{tpu_custom_call.1} parent=1 // pred_check_branch
      %12 = sbr.rel (0) target = $region5
    $region4: #{tpu_custom_call.1} parent=1 // pred_region
      %s14 = ssub.s32 288, 288
      %15 = vsyncadd [#allocation3], %s14
      %s17 = sshll.u32 [#allocation2], 4
      %s18 = int_to_ptr.vmem [resolvable:$true] %s17
      %20 = dma.hbm_to_vmem [thread:$0]  %s0, 288, %s18, [#allocation3]
    $region5: #{tpu_custom_call.1} parent=1 // pred_fallthru
      _
    // Predicated region
    $region6: #{tpu_custom_call.1} parent=1 // pred_check
      _
    $region7: #{tpu_custom_call.1} parent=1 // pred_check_branch
      %22 = sbr.rel (0) target = $region9
    $region8: #{tpu_custom_call.1} parent=1 // pred_region
      %s24 = ssub.s32 144, 144
      %25 = vsyncadd [#allocation6], %s24
      %s27 = sshll.u32 [#allocation5], 4
      %s28 = int_to_ptr.vmem [resolvable:$true] %s27
      %30 = dma.hbm_to_vmem [thread:$0]  %s1, 144, %s28, [#allocation6]
    $region9: #{tpu_custom_call.1} parent=1 // pred_fallthru
      _
    // Predicated region
    $region10: #{tpu_custom_call.1} parent=1 // pred_check
      _
    $region11: #{tpu_custom_call.1} parent=1 // pred_check_branch
      %32 = sbr.rel (0) target = $region13
    $region12: #{tpu_custom_call.1} parent=1 // pred_region
      %s34 = ssub.s32 144, 144
      %35 = vsyncadd [#allocation6], %s34
      %s37 = sshll.u32 [#allocation7], 4
      %s38 = int_to_ptr.vmem [resolvable:$true] %s37
      %40 = dma.hbm_to_vmem [thread:$0]  %s2, 144, %s38, [#allocation6]
    $region13: #{tpu_custom_call.1} parent=1 // pred_fallthru
      _
    // Predicated region
    $region14: #{tpu_custom_call.1} parent=1 // pred_check
      _
    $region15: #{tpu_custom_call.1} parent=1 // pred_check_branch
      %42 = sbr.rel (0) target = $region17
    $region16: #{tpu_custom_call.1} parent=1 // pred_region
      %43 = dma.done [#allocation3], 288
    $region17: #{tpu_custom_call.1} parent=1 // pred_fallthru
      _
    // Predicated region
    $region18: #{tpu_custom_call.1} parent=1 // pred_check
      _
    $region19: #{tpu_custom_call.1} parent=1 // pred_check_branch
      %45 = sbr.rel (0) target = $region21
    $region20: #{tpu_custom_call.1} parent=1 // pred_region
      %46 = dma.done [#allocation6], 144
    $region21: #{tpu_custom_call.1} parent=1 // pred_fallthru
      _
    // Predicated region
    $region22: #{tpu_custom_call.1} parent=1 // pred_check
      _
    $region23: #{tpu_custom_call.1} parent=1 // pred_check_branch
      %48 = sbr.rel (0) target = $region25
    $region24: #{tpu_custom_call.1} parent=1 // pred_region
      %49 = dma.done [#allocation6], 144
    $region25: #{tpu_custom_call.1} parent=1 // pred_fallthru
      _
    %v50 = vld [vmem:[#allocation2] sm:$0xff]
    %v51 = vld [vmem:[#allocation2 + $0x8] sm:$0xff]
    %v52 = vld [vmem:[#allocation2 + $0x10] sm:$0x3]
    %v53 = vld [vmem:[#allocation5] sm:$0xff]
    %v54 = vld [vmem:[#allocation5 + $0x8] sm:$0x1]
    %v57 = vlaneseq
    %v58 = vshrl.u32 %v57, 7
    %v59 = vsub.s32 0, %v58
    %v60 = vrot.slane %v53, %v59
    %v61 = vlaneseq
    %v62 = vshrl.u32 %v61, 7
    %v63 = vsub.s32 1, %v62
    %v64 = vrot.slane %v53, %v63
    %v65 = vlaneseq
    %v66 = vshrl.u32 %v65, 7
    %v67 = vsub.s32 2, %v66
    %v68 = vrot.slane %v53, %v67
    %v69 = vlaneseq
    %v70 = vshrl.u32 %v69, 7
    %v71 = vsub.s32 3, %v70
    %v72 = vrot.slane %v53, %v71
    %v73 = vlaneseq
    %v74 = vshrl.u32 %v73, 7
    %v75 = vsub.s32 4, %v74
    %v76 = vrot.slane %v53, %v75
    %v77 = vlaneseq
    %v78 = vshrl.u32 %v77, 7
    %v79 = vsub.s32 5, %v78
    %v80 = vrot.slane %v53, %v79
    %v81 = vlaneseq
    %v82 = vshrl.u32 %v81, 7
    %v83 = vsub.s32 6, %v82
    %v84 = vrot.slane %v53, %v83
    %v85 = vlaneseq
    %v86 = vshrl.u32 %v85, 7
    %v87 = vsub.s32 7, %v86
    %v88 = vrot.slane %v53, %v87
    %v89 = vlaneseq
    %v90 = vshrl.u32 %v89, 7
    %v91 = vsub.s32 0, %v90
    %v92 = vrot.slane %v54, %v91
    %v93 = vcombine.low %v60, %v64
    %v94 = vcombine.low %v68, %v72
    %v96 = vunpack.c.l.s4 1983009808
    %v97 = vunpack.c.0.s8 %v96
    %v98 = vlaneseq
    %v99 = vshrl.u32 %v98, 7
    %v100 = vsub.s32 %v97, %v99
    %v101 = vrot.slane %v93, %v100
    %v103 = vunpack.c.l.s4 1983009808
    %v104 = vunpack.c.0.s8 %v103
    %v105 = vlaneseq
    %v106 = vshrl.u32 %v105, 7
    %v107 = vsub.s32 %v104, %v106
    %v108 = vrot.slane %v94, %v107
    %v109 = vcombine.low %v101, %v108
    %v110 = vcombine.low %v76, %v80
    %v111 = vcombine.low %v84, %v88
    %v113 = vunpack.c.l.s4 1983009808
    %v114 = vunpack.c.0.s8 %v113
    %v115 = vlaneseq
    %v116 = vshrl.u32 %v115, 7
    %v117 = vsub.s32 %v114, %v116
    %v118 = vrot.slane %v110, %v117
    %v120 = vunpack.c.l.s4 1983009808
    %v121 = vunpack.c.0.s8 %v120
    %v122 = vlaneseq
    %v123 = vshrl.u32 %v122, 7
    %v124 = vsub.s32 %v121, %v123
    %v125 = vrot.slane %v111, %v124
    %v126 = vcombine.low %v118, %v125
    %v128 = vunpack.c.l.s4 1983009808
    %v129 = vunpack.c.0.s8 %v128
    %v130 = vlaneseq
    %v131 = vshrl.u32 %v130, 7
    %v132 = vsub.s32 %v129, %v131
    %v133 = vrot.slane %v92, %v132
    %v137 = vmul.f32 %v50, %v109
    %v138 = vmul.f32 %v51, %v126
    %v139 = vmul.f32 %v52, %v133
    %v140 = vld [vmem:[#allocation7] sm:$0xff]
    %v141 = vld [vmem:[#allocation7 + $0x8] sm:$0x1]
    %v144 = vlaneseq
    %v145 = vshrl.u32 %v144, 7
    %v146 = vsub.s32 0, %v145
    %v147 = vrot.slane %v140, %v146
    %v148 = vlaneseq
    %v149 = vshrl.u32 %v148, 7
    %v150 = vsub.s32 1, %v149
    %v151 = vrot.slane %v140, %v150
    %v152 = vlaneseq
    %v153 = vshrl.u32 %v152, 7
    %v154 = vsub.s32 2, %v153
    %v155 = vrot.slane %v140, %v154
    %v156 = vlaneseq
    %v157 = vshrl.u32 %v156, 7
    %v158 = vsub.s32 3, %v157
    %v159 = vrot.slane %v140, %v158
    %v160 = vlaneseq
    %v161 = vshrl.u32 %v160, 7
    %v162 = vsub.s32 4, %v161
    %v163 = vrot.slane %v140, %v162
    %v164 = vlaneseq
    %v165 = vshrl.u32 %v164, 7
    %v166 = vsub.s32 5, %v165
    %v167 = vrot.slane %v140, %v166
    %v168 = vlaneseq
    %v169 = vshrl.u32 %v168, 7
    %v170 = vsub.s32 6, %v169
    %v171 = vrot.slane %v140, %v170
    %v172 = vlaneseq
    %v173 = vshrl.u32 %v172, 7
    %v174 = vsub.s32 7, %v173
    %v175 = vrot.slane %v140, %v174
    %v176 = vlaneseq
    %v177 = vshrl.u32 %v176, 7
    %v178 = vsub.s32 0, %v177
    %v179 = vrot.slane %v141, %v178
    %v180 = vcombine.low %v147, %v151
    %v181 = vcombine.low %v155, %v159
    %v183 = vunpack.c.l.s4 1983009808
    %v184 = vunpack.c.0.s8 %v183
    %v185 = vlaneseq
    %v186 = vshrl.u32 %v185, 7
    %v187 = vsub.s32 %v184, %v186
    %v188 = vrot.slane %v180, %v187
    %v190 = vunpack.c.l.s4 1983009808
    %v191 = vunpack.c.0.s8 %v190
    %v192 = vlaneseq
    %v193 = vshrl.u32 %v192, 7
    %v194 = vsub.s32 %v191, %v193
    %v195 = vrot.slane %v181, %v194
    %v196 = vcombine.low %v188, %v195
    %v197 = vcombine.low %v163, %v167
    %v198 = vcombine.low %v171, %v175
    %v200 = vunpack.c.l.s4 1983009808
    %v201 = vunpack.c.0.s8 %v200
    %v202 = vlaneseq
    %v203 = vshrl.u32 %v202, 7
    %v204 = vsub.s32 %v201, %v203
    %v205 = vrot.slane %v197, %v204
    %v207 = vunpack.c.l.s4 1983009808
    %v208 = vunpack.c.0.s8 %v207
    %v209 = vlaneseq
    %v210 = vshrl.u32 %v209, 7
    %v211 = vsub.s32 %v208, %v210
    %v212 = vrot.slane %v198, %v211
    %v213 = vcombine.low %v205, %v212
    %v215 = vunpack.c.l.s4 1983009808
    %v216 = vunpack.c.0.s8 %v215
    %v217 = vlaneseq
    %v218 = vshrl.u32 %v217, 7
    %v219 = vsub.s32 %v216, %v218
    %v220 = vrot.slane %v179, %v219
    %v224 = vadd.f32 %v137, %v196
    %v225 = vadd.f32 %v138, %v213
    %v226 = vadd.f32 %v139, %v220
    %227 = vst [vmem:[#allocation8] sm:$0xff] %v224
    %228 = vst [vmem:[#allocation8 + $0x8] sm:$0xff] %v225
    %229 = vst [vmem:[#allocation8 + $0x10] sm:$0x3] %v226
    // Predicated region
    $region26: #{tpu_custom_call.1} parent=1 // pred_check
      _
    $region27: #{tpu_custom_call.1} parent=1 // pred_check_branch
      %231 = sbr.rel (0) target = $region29
    $region28: #{tpu_custom_call.1} parent=1 // pred_region
      %s233 = ssub.s32 288, 288
      %234 = vsyncadd [#allocation4], %s233
      %s236 = sshll.u32 [#allocation8], 4
      %s237 = int_to_ptr.vmem [resolvable:$true] %s236
      %239 = dma.vmem_to_hbm [thread:$0]  %s237, 288, %s3, [#allocation4]
    $region29: #{tpu_custom_call.1} parent=1 // pred_fallthru
      _
    // Predicated region
    $region30: #{tpu_custom_call.1} parent=1 // pred_check
      _
    $region31: #{tpu_custom_call.1} parent=1 // pred_check_branch
      %241 = sbr.rel (0) target = $region33
    $region32: #{tpu_custom_call.1} parent=1 // pred_region
      %242 = dma.done [#allocation4], 288
    $region33: #{tpu_custom_call.1} parent=1 // pred_fallthru
      _
    %243 = vsyncpa [#allocation3], 1
    %244 = vsyncpa [#allocation6], 1
    %245 = vsyncpa [#allocation4], 1

</llo_original>
